<compile_context>
chip_gen: v7x
topology: tpu7x:2x2x1
jax: 0.10.0
libtpu: 0.0.40
codegen_flags: <defaults>
</compile_context>

<pallas_src>
import numpy as np
import jax
import jax.numpy as jnp
from jax import lax
from jax.experimental import pallas as pl
from jax.experimental.pallas import tpu as pltpu

# Model dimensions.
C, H, W = 3, 9, 9
OC, KSZ = 24, 5
OH, OW = H - KSZ + 1, W - KSZ + 1        # 5, 5
FEAT = OC * OH * OW                      # 600  (fc1 input)
OUT = 160                                # fc1 output
K_IN = C * H * W                         # 243  (flattened input pixels per frame)

OUT_PAD = 256                            # lane-dense output width (160 -> 256 zero columns)
TM_MAX = 256                             # max batch rows per grid block


# ---------------------------------------------------------------------------
# Fused kernel: out = tanh(x_flat @ W_comb + b_comb)   (dropout = identity in eval).
# W_comb already contains features(conv) AND fc1, folded offline.
# ---------------------------------------------------------------------------
def cnnfc_kernel(x_ref, w_ref, b_ref, o_ref):
    y = jnp.dot(x_ref[...], w_ref[...], preferred_element_type=jnp.float32)
    o_ref[...] = jnp.tanh(y + b_ref[...]).astype(o_ref.dtype)


# ---------------------------------------------------------------------------
# Offline weight preparation (host-side numpy, done once, float64 accumulation).
# ---------------------------------------------------------------------------
def conv_as_matrix(conv_w_np):
    """Dense M of shape (C*H*W, OC*OH*OW) such that x_flat @ M == CHW-flattened VALID conv2d(x)."""
    mat = np.zeros((K_IN, FEAT), np.float64)
    oc, oh, ow, c, kh, kw = np.indices((OC, OH, OW, C, KSZ, KSZ))
    rows = c * H * W + (oh + kh) * W + (ow + kw)              # input pixel index
    cols = oc * OH * OW + oh * OW + ow                        # CHW-flattened output index
    mat[rows.ravel(), cols.ravel()] = conv_w_np[oc, c, kh, kw].astype(np.float64).ravel()
    return mat


def prepare_params(p):
    """Fold conv + fc1 into one matmul's weight/bias (float64 fold, f32 cast, lane-padded)."""
    conv_mat = conv_as_matrix(np.asarray(p["conv_w"]))                       # (243, 600) f64
    conv_b_e = np.repeat(np.asarray(p["conv_b"], np.float64), OH * OW)       # (600,) per CHW pos
    fc1_wT = np.asarray(p["fc1_w"], np.float64).T                            # (600, 160)
    w_comb = conv_mat @ fc1_wT                                               # (243, 160)
    b_comb = conv_b_e @ fc1_wT + np.asarray(p["fc1_b"], np.float64)          # (160,)

    w_pad = np.zeros((K_IN, OUT_PAD), np.float32)
    w_pad[:, :OUT] = w_comb.astype(np.float32)
    b_pad = np.zeros((1, OUT_PAD), np.float32)
    b_pad[0, :OUT] = b_comb.astype(np.float32)
    return jnp.asarray(w_pad), jnp.asarray(b_pad)


def _round_up(a, b):
    return -(-a // b) * b


# ---------------------------------------------------------------------------
# Forward pass (single pallas_call).
# ---------------------------------------------------------------------------
def cnnfc_forward(x, prepped):
    w_comb, b_comb = prepped
    N = x.shape[0]
    xf = x.reshape(N, K_IN).astype(jnp.float32)               # contiguous flatten, no K padding

    # Row block: big enough to amortize the ~0.35us grid-step overhead, but keep >= 2 grid
    # steps (when batch allows) so v7x's two TensorCores both get work on the parallel axis.
    tm = max(8, min(TM_MAX, (_round_up(N, 8) // 2) // 8 * 8)) if N >= 16 else 8
    Np = _round_up(N, tm)
    if Np != N:
        xf = jnp.pad(xf, ((0, Np - N), (0, 0)))                # cheap M-only padding

    out = pl.pallas_call(
        cnnfc_kernel,
        out_shape=jax.ShapeDtypeStruct((Np, OUT_PAD), jnp.float32),
        grid=(Np // tm,),
        in_specs=[
            pl.BlockSpec((tm, K_IN), lambda i: (i, 0)),        # x rows; K == full dim (legal)
            pl.BlockSpec((K_IN, OUT_PAD), lambda i: (0, 0)),   # folded weight (resident)
            pl.BlockSpec((1, OUT_PAD), lambda i: (0, 0)),      # folded bias (resident)
        ],
        out_specs=pl.BlockSpec((tm, OUT_PAD), lambda i: (i, 0)),  # lane-dense 256-wide store
        compiler_params=pltpu.CompilerParams(
            dimension_semantics=("parallel",)),                # batch axis -> v7x dual-TC
    )(xf, w_comb, b_comb)
    return out[:N, :OUT]                                       # drop padded rows / zero columns


# ---------------------------------------------------------------------------
# Deterministic parameter init (shapes from the module's __init__).
# ---------------------------------------------------------------------------
def init_params(key):
    ks = jax.random.split(key, 4)
    s = 0.05
    return dict(
        conv_w=jax.random.normal(ks[0], (OC, C, KSZ, KSZ), jnp.float32) * s,
        conv_b=jax.random.normal(ks[1], (OC,), jnp.float32) * s,
        fc1_w=jax.random.normal(ks[2], (OUT, FEAT), jnp.float32) * s,
        fc1_b=jax.random.normal(ks[3], (OUT,), jnp.float32) * s,
    )


# ---------------------------------------------------------------------------
# Pure-JAX reference (same semantics as CNNFC.forward, eval mode).
# ---------------------------------------------------------------------------
def reference_forward(x, p):
    conv = lax.conv_general_dilated(x, p["conv_w"], (1, 1), "VALID",
                                    dimension_numbers=("NCHW", "OIHW", "NCHW"))
    conv = conv + p["conv_b"][None, :, None, None]             # (N, 24, 5, 5)
    flat = conv.reshape(x.shape[0], -1)                        # CHW-major flatten -> (N, 600)
    return jnp.tanh(flat @ p["fc1_w"].T + p["fc1_b"])          # dropout = identity (eval)


if __name__ == "__main__":
    key = jax.random.PRNGKey(0)
    kx, kp = jax.random.split(key)

    B = 16                                                     # small batch, >= 16 -> 2 grid steps
    x = jax.random.normal(kx, (B, C, H, W), jnp.float32)       # NCHW frames, 9x9 -> conv -> 24x5x5
    params = init_params(kp)
    prepped = prepare_params(params)

    out = cnnfc_forward(x, prepped)
    out = jax.block_until_ready(out)
    assert out.shape == (B, OUT)

    ref = reference_forward(x, params)
    np.testing.assert_allclose(np.asarray(out), np.asarray(ref), rtol=1e-3, atol=1e-4)

    print("KERNEL_OK")
</pallas_src>

<mosaic_0001>
module attributes {stable_mosaic.version = 11 : i64} {
  func.func @cnnfc_kernel(%arg0: i32, %arg1: memref<8x243xf32, #tpu.memory_space<vmem>>, %arg2: memref<243x256xf32, #tpu.memory_space<vmem>>, %arg3: memref<1x256xf32, #tpu.memory_space<vmem>>, %arg4: memref<8x256xf32, #tpu.memory_space<vmem>>) attributes {dimension_semantics = [#tpu.dimension_semantics<parallel>], iteration_bounds = array<i64: 2>, scalar_prefetch = 0 : i64, scratch_operands = 0 : i64, tpu.core_type = #tpu.core_type<tc>, window_params = [{transform_indices = @transform_0, window_bounds = array<i64: 8, 243>}, {pipeline_mode = #tpu.pipeline_mode<synchronous>, transform_indices = @transform_1, window_bounds = array<i64: 243, 256>}, {pipeline_mode = #tpu.pipeline_mode<synchronous>, transform_indices = @transform_2, window_bounds = array<i64: 1, 256>}, {transform_indices = @transform_3, window_bounds = array<i64: 8, 256>}]} {
    %c0 = arith.constant 0 : index
    %c0_0 = arith.constant 0 : index
    %0 = vector.load %arg1[%c0, %c0_0] : memref<8x243xf32, #tpu.memory_space<vmem>>, vector<8x243xf32>
    %c0_1 = arith.constant 0 : index
    %c0_2 = arith.constant 0 : index
    %1 = vector.load %arg2[%c0_1, %c0_2] : memref<243x256xf32, #tpu.memory_space<vmem>>, vector<243x256xf32>
    %cst = arith.constant dense<0.000000e+00> : vector<8x256xf32>
    %2 = tpu.matmul %0, %1, %cst {dimension_numbers = #tpu.dot_dimension_numbers<[1], [0], [0], [1], [0, 0, 1, 1], [], []>} : vector<8x243xf32>, vector<243x256xf32>, vector<8x256xf32> -> vector<8x256xf32>
    %c0_3 = arith.constant 0 : index
    %c0_4 = arith.constant 0 : index
    %3 = vector.load %arg3[%c0_3, %c0_4] : memref<1x256xf32, #tpu.memory_space<vmem>>, vector<1x256xf32>
    %4 = vector.broadcast %3 : vector<1x256xf32> to vector<8x256xf32>
    %5 = arith.addf %2, %4 : vector<8x256xf32>
    %6 = math.tanh %5 : vector<8x256xf32>
    %c0_5 = arith.constant 0 : index
    %c0_6 = arith.constant 0 : index
    %7 = vector.load %arg4[%c0_5, %c0_6] : memref<8x256xf32, #tpu.memory_space<vmem>>, vector<8x256xf32>
    tpu.vector_store %arg4[%c0_5, %c0_6], %6 {strides = array<i32>} : memref<8x256xf32, #tpu.memory_space<vmem>>, vector<8x256xf32>,
    return
  }
  func.func @transform_0(%arg0: i32) -> (i32, i32) {
    %c0_i32 = arith.constant 0 : i32
    %c0_i32_0 = arith.constant 0 : i32
    return %arg0, %c0_i32 : i32, i32
  }
  func.func @transform_1(%arg0: i32) -> (i32, i32) {
    %c0_i32 = arith.constant 0 : i32
    %c0_i32_0 = arith.constant 0 : i32
    %c0_i32_1 = arith.constant 0 : i32
    return %c0_i32, %c0_i32_0 : i32, i32
  }
  func.func @transform_2(%arg0: i32) -> (i32, i32) {
    %c0_i32 = arith.constant 0 : i32
    %c0_i32_0 = arith.constant 0 : i32
    %c0_i32_1 = arith.constant 0 : i32
    return %c0_i32, %c0_i32_0 : i32, i32
  }
  func.func @transform_3(%arg0: i32) -> (i32, i32) {
    %c0_i32 = arith.constant 0 : i32
    %c0_i32_0 = arith.constant 0 : i32
    return %arg0, %c0_i32 : i32, i32
  }
}

</mosaic_0001>

<llo_original>
// kernel: tpu_custom_call.1
$region0: #{tpu_custom_call.1}
  #allocation0 [shape = 'u32[]', space=smem, size = 0x4, offset = 0x4, fixed_abs, tag = 'smem constant byte address 0x4 - core index']
  #allocation1 [shape = 'u32[144,128]{1,0:T(1,128)}', space=vmem, size = 0x12000, scoped, tag = 'internal scratch']
  %s0 = inlined_call_operand.hbm [shape: f32[16,243], index: 0, kind: input, shape index: {}]
  %s1 = inlined_call_operand.hbm [shape: f32[243,256], index: 1, kind: input, shape index: {}]
  %s2 = inlined_call_operand.vmem [shape: f32[1,256], index: 2, kind: input, shape index: {}]
  %s3 = inlined_call_operand.hbm [shape: f32[16,256], index: 3, kind: output, shape index: {}]
  %s4 = sld [smem:[#allocation0]]
  $region53: #{tpu_custom_call.1} parent=0
    _
  %s6 = ssub.s32 1, %s4
  %s7 = scalar_select 0, %s6, %s4
  $region1: #{tpu_custom_call.1} parent=0
    #allocation2 [shape = 'u8[16384]{0}', space=vmem, size = 0x4000, scoped, tag = 'input window, operand 0']
    #allocation3 [shape = 's32[2]{0}', space=sflag, size = 0x8, scoped, tag = 'scoped memory for tpu_custom_call.1']
    #allocation4 [shape = 's32[2]{0}', space=sflag, size = 0x8, scoped, tag = 'scoped memory for tpu_custom_call.1']
    #allocation5 [shape = 'u8[253952]{0}', space=vmem, size = 0x3e000, scoped, tag = 'input window, operand 1, single buffered']
    #allocation6 [shape = 's32[1]{0}', space=sflag, size = 0x4, scoped, tag = 'scoped memory for tpu_custom_call.1']
    #allocation7 [shape = 'u8[16384]{0}', space=vmem, size = 0x4000, scoped, tag = 'output window, operand 0']
    %8 = vsyncpa [#allocation3], 0
    %s9 = scalar_lea.sflag [#allocation3], 1
    %10 = vsyncpa %s9, 0
    %11 = vsyncpa [#allocation6], 0
    %12 = vsyncpa [#allocation4], 0
    %s13 = scalar_lea.sflag [#allocation4], 1
    %14 = vsyncpa %s13, 0
    loop: start=0, step=1, limit=4
    $region2: #{tpu_custom_call.1} parent=1 // loop_pre_header
      _
    $region3: #{tpu_custom_call.1} parent=1 // loop_header
      %s16 = sphi 0, %s20
      %p17 = scmp.ge.s32.totalorder %s16, 4
      %s26 = sphi 0, %s28
      %s29 = sphi 0, %s26
      %s30 = sphi 0, %s29
      %s46 = sphi 0, %s30
      %s50 = sphi 0, %s50
      %s52 = sphi 0, %s50
      %s53 = sphi 0, %s52
      %s67 = sphi 0, %s53
      %s71 = sphi 0, %s71
      %s73 = sphi 0, %s71
      %s74 = sphi 0, %s73
      %s88 = sphi 0, %s74
      %s94 = sphi 0, %s96
      %s97 = sphi 0, %s94
      %s98 = sphi 0, %s97
      %s114 = sphi 0, %s98
    $region4: #{tpu_custom_call.1} parent=1 // loop_header_branch
      %19 = sbr.rel (%p17) target = $region8
    $region5: #{tpu_custom_call.1} parent=1 // loop_body
      %s21 = ssub.s32 %s16, 1
      %s22 = ssub.s32 %s16, 2
      %s23 = sadd.s32 %s16, 1
      %s24 = ssub.s32 %s16, %s23
      %p25 = scmp.eq.s32.totalorder %s24, 0
      %s27 = sadd.s32 %s26, 1
      %s28 = scalar_select %p25, %s26, %s27
      %p31 = pneg %p25
      %p32 = scmp.eq.s32.totalorder %s16, 1
      %p33 = por %p31, %p32
      %p34 = scmp.ne.s32.totalorder %s26, %s29
      %p35 = scmp.eq.s32.totalorder %s16, 0
      %p36 = por %p34, %p35
      %p37 = scmp.ne.s32.totalorder %s26, %s29
      %p38 = scmp.eq.s32.totalorder %s21, 1
      %p39 = por %p37, %p38
      %p40 = scmp.ne.s32.totalorder %s29, %s30
      %p41 = scmp.eq.s32.totalorder %s21, 0
      %p42 = por %p40, %p41
      %p43 = scmp.ne.s32.totalorder %s29, %s30
      %p44 = scmp.eq.s32.totalorder %s22, 1
      %p45 = por %p43, %p44
      %p47 = scmp.ne.s32.totalorder %s30, %s46
      %p48 = scmp.eq.s32.totalorder %s22, 0
      %p49 = por %p47, %p48
      %s51 = sadd.s32 %s50, 1
      %p54 = scmp.eq.s32.totalorder %s16, 1
      %p55 = scmp.ne.s32.totalorder %s50, %s52
      %p56 = scmp.eq.s32.totalorder %s16, 0
      %p57 = por %p55, %p56
      %p58 = scmp.ne.s32.totalorder %s50, %s52
      %p59 = scmp.eq.s32.totalorder %s21, 1
      %p60 = por %p58, %p59
      %p61 = scmp.ne.s32.totalorder %s52, %s53
      %p62 = scmp.eq.s32.totalorder %s21, 0
      %p63 = por %p61, %p62
      %p64 = scmp.ne.s32.totalorder %s52, %s53
      %p65 = scmp.eq.s32.totalorder %s22, 1
      %p66 = por %p64, %p65
      %p68 = scmp.ne.s32.totalorder %s53, %s67
      %p69 = scmp.eq.s32.totalorder %s22, 0
      %p70 = por %p68, %p69
      %s72 = sadd.s32 %s71, 1
      %p75 = scmp.eq.s32.totalorder %s16, 1
      %p76 = scmp.ne.s32.totalorder %s71, %s73
      %p77 = scmp.eq.s32.totalorder %s16, 0
      %p78 = por %p76, %p77
      %p79 = scmp.ne.s32.totalorder %s71, %s73
      %p80 = scmp.eq.s32.totalorder %s21, 1
      %p81 = por %p79, %p80
      %p82 = scmp.ne.s32.totalorder %s73, %s74
      %p83 = scmp.eq.s32.totalorder %s21, 0
      %p84 = por %p82, %p83
      %p85 = scmp.ne.s32.totalorder %s73, %s74
      %p86 = scmp.eq.s32.totalorder %s22, 1
      %p87 = por %p85, %p86
      %p89 = scmp.ne.s32.totalorder %s74, %s88
      %p90 = scmp.eq.s32.totalorder %s22, 0
      %p91 = por %p89, %p90
      %s92 = ssub.s32 %s16, %s23
      %p93 = scmp.eq.s32.totalorder %s92, 0
      %s95 = sadd.s32 %s94, 1
      %s96 = scalar_select %p93, %s94, %s95
      %p99 = pneg %p93
      %p100 = scmp.eq.s32.totalorder %s16, 1
      %p101 = por %p99, %p100
      %p102 = scmp.ne.s32.totalorder %s94, %s97
      %p103 = scmp.eq.s32.totalorder %s16, 0
      %p104 = por %p102, %p103
      %p105 = scmp.ne.s32.totalorder %s94, %s97
      %p106 = scmp.eq.s32.totalorder %s21, 1
      %p107 = por %p105, %p106
      %p108 = scmp.ne.s32.totalorder %s97, %s98
      %p109 = scmp.eq.s32.totalorder %s21, 0
      %p110 = por %p108, %p109
      %p111 = scmp.ne.s32.totalorder %s97, %s98
      %p112 = scmp.eq.s32.totalorder %s22, 1
      %p113 = por %p111, %p112
      %p115 = scmp.ne.s32.totalorder %s98, %s114
      %p116 = scmp.eq.s32.totalorder %s22, 0
      %p117 = por %p115, %p116
      %p118 = scmp.le.s32.totalorder 1, %s16
      %p119 = scmp.lt.s32.totalorder %s16, 3
      %p120 = pnand %p118, %p119
      %p121 = pneg %p120
      // Predicated region
      $region9: #{tpu_custom_call.1} parent=5 // pred_check
        _
      $region10: #{tpu_custom_call.1} parent=5 // pred_check_branch
        %123 = sbr.rel (%p120) target = $region12
      $region11: #{tpu_custom_call.1} parent=5 // pred_region
        %s124 = ssub.s32 %s16, 1
        // Predicated region
        $region13: #{tpu_custom_call.1} parent=11 // pred_check
          %p125 = pneg %p63
        $region14: #{tpu_custom_call.1} parent=11 // pred_check_branch
          %127 = sbr.rel (%p125) target = $region16
        $region15: #{tpu_custom_call.1} parent=11 // pred_region
          %s129 = ssub.s32 7936, 7936
          %130 = vsyncadd [#allocation6], %s129
          %s131 = sshll.u32 [#allocation5], 4
          %s132 = int_to_ptr.vmem [resolvable:$true] %s131
          %137 = dma.hbm_to_vmem [thread:$0]  %s1, 7936, %s132, [#allocation6], 256, 256, 16
        $region16: #{tpu_custom_call.1} parent=11 // pred_fallthru
          _
        // Predicated region
        $region17: #{tpu_custom_call.1} parent=11 // pred_check
          %p138 = pneg %p84
        $region18: #{tpu_custom_call.1} parent=11 // pred_check_branch
          %140 = sbr.rel (%p138) target = $region20
        $region19: #{tpu_custom_call.1} parent=11 // pred_region
          _
        $region20: #{tpu_custom_call.1} parent=11 // pred_fallthru
          _
      $region12: #{tpu_custom_call.1} parent=5 // pred_fallthru
        _
      %p141 = scmp.lt.s32.totalorder %s16, 2
      // Predicated region
      $region21: #{tpu_custom_call.1} parent=5 // pred_check
        %p142 = pneg %p141
      $region22: #{tpu_custom_call.1} parent=5 // pred_check_branch
        %144 = sbr.rel (%p142) target = $region24
      $region23: #{tpu_custom_call.1} parent=5 // pred_region
        // Predicated region
        $region25: #{tpu_custom_call.1} parent=23 // pred_check
          %p145 = pneg %p36
        $region26: #{tpu_custom_call.1} parent=23 // pred_check_branch
          %147 = sbr.rel (%p145) target = $region28
        $region27: #{tpu_custom_call.1} parent=23 // pred_region
          %s148 = sand.u32 %s26, 1
          %s149 = scalar_lea.sflag [#allocation3], %s148
          %s150 = sand.u32 %s26, 1
          %s151 = smul.addr %s150, 16
          %s152 = scalar_lea.vmem [#allocation2], %s151
          %s154 = ssub.s32 256, 256
          %155 = vsyncadd %s149, %s154
          %s156 = smul.addr %s16, 2
          %s157 = smul.addr %s156, 128
          %s158 = scalar_lea.hbm %s0, %s157
          %s160 = sshll.u32 %s152, 4
          %s161 = int_to_ptr.vmem [resolvable:$true] %s160
          %163 = dma.hbm_to_vmem [thread:$0]  %s158, 256, %s161, %s149
        $region28: #{tpu_custom_call.1} parent=23 // pred_fallthru
          _
      $region24: #{tpu_custom_call.1} parent=5 // pred_fallthru
        _
      %p164 = scmp.le.s32.totalorder 1, %s16
      %p165 = scmp.lt.s32.totalorder %s16, 3
      %p166 = pnand %p164, %p165
      %p167 = pneg %p166
      // Predicated region
      $region29: #{tpu_custom_call.1} parent=5 // pred_check
        _
      $region30: #{tpu_custom_call.1} parent=5 // pred_check_branch
        %169 = sbr.rel (%p166) target = $region32
      $region31: #{tpu_custom_call.1} parent=5 // pred_region
        %s170 = ssub.s32 %s16, 1
        %s171 = sand.u32 %s29, 1
        %s172 = scalar_lea.sflag [#allocation3], %s171
        %s173 = sand.u32 %s29, 1
        %s174 = smul.addr %s173, 16
        %s175 = scalar_lea.vmem [#allocation2], %s174
        // Predicated region
        $region33: #{tpu_custom_call.1} parent=31 // pred_check
          %p176 = pneg %p42
        $region34: #{tpu_custom_call.1} parent=31 // pred_check_branch
          %178 = sbr.rel (%p176) target = $region36
        $region35: #{tpu_custom_call.1} parent=31 // pred_region
          %179 = dma.done %s172, 256
        $region36: #{tpu_custom_call.1} parent=31 // pred_fallthru
          _
        // Predicated region
        $region37: #{tpu_custom_call.1} parent=31 // pred_check
          %p180 = pneg %p63
        $region38: #{tpu_custom_call.1} parent=31 // pred_check_branch
          %182 = sbr.rel (%p180) target = $region40
        $region39: #{tpu_custom_call.1} parent=31 // pred_region
          %183 = dma.done [#allocation6], 7936
        $region40: #{tpu_custom_call.1} parent=31 // pred_fallthru
          _
        %s184 = sand.u32 %s29, 1
        %s185 = scalar_lea.sflag [#allocation3], %s184
        %s186 = sand.u32 %s29, 1
        %s187 = smul.addr %s186, 16
        %s188 = scalar_lea.vmem [#allocation2], %s187
        %p189 = pneg %p42
        %p190 = pneg %p39
        %p191 = pneg %p63
        %p192 = pneg %p60
        %p193 = pneg %p84
        %p194 = pneg %p81
        %p195 = pneg %p110
        %p196 = pneg %p107
        %s197 = sand.u32 %s97, 1
        %s198 = scalar_lea.sflag [#allocation4], %s197
        %s199 = sand.u32 %s97, 1
        %s200 = smul.addr %s199, 16
        %s201 = scalar_lea.vmem [#allocation7], %s200
        %v202 = vld [vmem:[%s175] sm:$0xff]
        %v203 = vld [vmem:[%s175 + $0x8] sm:$0xff]
        %v204 = vld [vmem:[#allocation5] sm:$0xff]
        %v205 = vld [vmem:[#allocation5 + $0x8] sm:$0xff]
        %v206 = vld [vmem:[#allocation5 + $0x10] sm:$0xff]
        %v207 = vld [vmem:[#allocation5 + $0x18] sm:$0xff]
        %v208 = vld [vmem:[#allocation5 + $0x20] sm:$0xff]
        %v209 = vld [vmem:[#allocation5 + $0x28] sm:$0xff]
        %v210 = vld [vmem:[#allocation5 + $0x30] sm:$0xff]
        %v211 = vld [vmem:[#allocation5 + $0x38] sm:$0xff]
        %v212 = vld [vmem:[#allocation5 + $0x40] sm:$0xff]
        %v213 = vld [vmem:[#allocation5 + $0x48] sm:$0xff]
        %v214 = vld [vmem:[#allocation5 + $0x50] sm:$0xff]
        %v215 = vld [vmem:[#allocation5 + $0x58] sm:$0xff]
        %v216 = vld [vmem:[#allocation5 + $0x60] sm:$0xff]
        %v217 = vld [vmem:[#allocation5 + $0x68] sm:$0xff]
        %v218 = vld [vmem:[#allocation5 + $0x70] sm:$0xff]
        %v219 = vld [vmem:[#allocation5 + $0x78] sm:$0xff]
        %v220 = vld [vmem:[#allocation5 + $0x80] sm:$0xff]
        %v221 = vld [vmem:[#allocation5 + $0x88] sm:$0xff]
        %v222 = vld [vmem:[#allocation5 + $0x90] sm:$0xff]
        %v223 = vld [vmem:[#allocation5 + $0x98] sm:$0xff]
        %v224 = vld [vmem:[#allocation5 + $0xa0] sm:$0xff]
        %v225 = vld [vmem:[#allocation5 + $0xa8] sm:$0xff]
        %v226 = vld [vmem:[#allocation5 + $0xb0] sm:$0xff]
        %v227 = vld [vmem:[#allocation5 + $0xb8] sm:$0xff]
        %v228 = vld [vmem:[#allocation5 + $0xc0] sm:$0xff]
        %v229 = vld [vmem:[#allocation5 + $0xc8] sm:$0xff]
        %v230 = vld [vmem:[#allocation5 + $0xd0] sm:$0xff]
        %v231 = vld [vmem:[#allocation5 + $0xd8] sm:$0xff]
        %v232 = vld [vmem:[#allocation5 + $0xe0] sm:$0xff]
        %v233 = vld [vmem:[#allocation5 + $0xe8] sm:$0xff]
        %v234 = vld [vmem:[#allocation5 + $0xf0] sm:$0xff]
        %v235 = vld [vmem:[#allocation5 + $0xf8] sm:$0xff]
        %v236 = vld [vmem:[#allocation5 + $0x100] sm:$0xff]
        %v237 = vld [vmem:[#allocation5 + $0x108] sm:$0xff]
        %v238 = vld [vmem:[#allocation5 + $0x110] sm:$0xff]
        %v239 = vld [vmem:[#allocation5 + $0x118] sm:$0xff]
        %v240 = vld [vmem:[#allocation5 + $0x120] sm:$0xff]
        %v241 = vld [vmem:[#allocation5 + $0x128] sm:$0xff]
        %v242 = vld [vmem:[#allocation5 + $0x130] sm:$0xff]
        %v243 = vld [vmem:[#allocation5 + $0x138] sm:$0xff]
        %v244 = vld [vmem:[#allocation5 + $0x140] sm:$0xff]
        %v245 = vld [vmem:[#allocation5 + $0x148] sm:$0xff]
        %v246 = vld [vmem:[#allocation5 + $0x150] sm:$0xff]
        %v247 = vld [vmem:[#allocation5 + $0x158] sm:$0xff]
        %v248 = vld [vmem:[#allocation5 + $0x160] sm:$0xff]
        %v249 = vld [vmem:[#allocation5 + $0x168] sm:$0xff]
        %v250 = vld [vmem:[#allocation5 + $0x170] sm:$0xff]
        %v251 = vld [vmem:[#allocation5 + $0x178] sm:$0xff]
        %v252 = vld [vmem:[#allocation5 + $0x180] sm:$0xff]
        %v253 = vld [vmem:[#allocation5 + $0x188] sm:$0xff]
        %v254 = vld [vmem:[#allocation5 + $0x190] sm:$0xff]
        %v255 = vld [vmem:[#allocation5 + $0x198] sm:$0xff]
        %v256 = vld [vmem:[#allocation5 + $0x1a0] sm:$0xff]
        %v257 = vld [vmem:[#allocation5 + $0x1a8] sm:$0xff]
        %v258 = vld [vmem:[#allocation5 + $0x1b0] sm:$0xff]
        %v259 = vld [vmem:[#allocation5 + $0x1b8] sm:$0xff]
        %v260 = vld [vmem:[#allocation5 + $0x1c0] sm:$0xff]
        %v261 = vld [vmem:[#allocation5 + $0x1c8] sm:$0xff]
        %v262 = vld [vmem:[#allocation5 + $0x1d0] sm:$0xff]
        %v263 = vld [vmem:[#allocation5 + $0x1d8] sm:$0xff]
        %v264 = vld [vmem:[#allocation5 + $0x1e0] sm:$0x7]
        %v265 = vld [vmem:[#allocation5 + $0x1e8] sm:$0x7]
        %v266 = vld [vmem:[%s2] sm:$0x3]
        %v268 = vlaneseq
        %v269 = vshrl.u32 %v268, 7
        %v270 = vsub.s32 0, %v269
        %v271 = vrot.slane %v266, %v270
        %v272 = vlaneseq
        %v273 = vshrl.u32 %v272, 7
        %v274 = vsub.s32 1, %v273
        %v275 = vrot.slane %v266, %v274
        %vm278 = vcmask 941056
        %v280 = vsel %vm278, %v203, 0
        %vm282 = vcmask 1042432
        %v284 = vsel %vm282, %v264, 0
        %v287 = vsel %vm282, %v265, 0
        %289 = vmatprep.subr.mxu0 %v205
        %290 = vmatpush1.msra.mxu0 %v204
        %291 = vmatprep.subr.mxu0 %v207
        %292 = vmatpush1.msra.mxu0 %v206
        %293 = vmatprep.subr.mxu0 %v209
        %294 = vmatpush1.msra.mxu0 %v208
        %295 = vmatprep.subr.mxu0 %v211
        %296 = vmatpush1.msra.mxu0 %v210
        %297 = vmatprep.subr.mxu0 %v213
        %298 = vmatpush1.msra.mxu0 %v212
        %299 = vmatprep.subr.mxu0 %v215
        %300 = vmatpush1.msra.mxu0 %v214
        %301 = vmatprep.subr.mxu0 %v217
        %302 = vmatpush1.msra.mxu0 %v216
        %303 = vmatprep.subr.mxu0 %v219
        %304 = vmatpush1.msra.mxu0 %v218
        %305 = vmatprep.subr.mxu0 %v221
        %306 = vmatpush1.msra.mxu0 %v220
        %307 = vmatprep.subr.mxu0 %v223
        %308 = vmatpush1.msra.mxu0 %v222
        %309 = vmatprep.subr.mxu0 %v225
        %310 = vmatpush1.msra.mxu0 %v224
        %311 = vmatprep.subr.mxu0 %v227
        %312 = vmatpush1.msra.mxu0 %v226
        %313 = vmatprep.subr.mxu0 %v229
        %314 = vmatpush1.msra.mxu0 %v228
        %315 = vmatprep.subr.mxu0 %v231
        %316 = vmatpush1.msra.mxu0 %v230
        %317 = vmatprep.subr.mxu0 %v233
        %318 = vmatpush1.msra.mxu0 %v232
        %319 = vmatprep.subr.mxu0 %v235
        %320 = vmatpush1.msra.mxu0 %v234
        %321 = vmatprep.subr.mxu0 %v237
        %322 = vmatpush1.msra.mxu0 %v236
        %323 = vmatprep.subr.mxu0 %v239
        %324 = vmatpush1.msra.mxu0 %v238
        %325 = vmatprep.subr.mxu0 %v241
        %326 = vmatpush1.msra.mxu0 %v240
        %327 = vmatprep.subr.mxu0 %v243
        %328 = vmatpush1.msra.mxu0 %v242
        %329 = vmatprep.subr.mxu0 %v245
        %330 = vmatpush1.msra.mxu0 %v244
        %331 = vmatprep.subr.mxu0 %v247
        %332 = vmatpush1.msra.mxu0 %v246
        %333 = vmatprep.subr.mxu0 %v249
        %334 = vmatpush1.msra.mxu0 %v248
        %335 = vmatprep.subr.mxu0 %v251
        %336 = vmatpush1.msra.mxu0 %v250
        %337 = vmatprep.subr.mxu0 %v253
        %338 = vmatpush1.msra.mxu0 %v252
        %339 = vmatprep.subr.mxu0 %v255
        %340 = vmatpush1.msra.mxu0 %v254
        %341 = vmatprep.subr.mxu0 %v257
        %342 = vmatpush1.msra.mxu0 %v256
        %343 = vmatprep.subr.mxu0 %v259
        %344 = vmatpush1.msra.mxu0 %v258
        %345 = vmatprep.subr.mxu0 %v261
        %346 = vmatpush1.msra.mxu0 %v260
        %347 = vmatprep.subr.mxu0 %v263
        %348 = vmatpush1.msra.mxu0 %v262
        %349 = vmatprep.subr.mxu0 %v287
        %350 = vmatpush1.msra.mxu0 %v284
        %351 = vmatprep.subr.mxu0 0.0
        %352 = vmatpush1.msra.mxu0 0.0
        %353 = vmatprep.mubr.f32.mxu0 %v280
        %354 = vmatmul.mubr.f32.gmra.mrb[0].mxu0 %v202
        %v355 = vpop.f32.mrb[0].mxu0
        %v356 = vadd.f32 %v271, %v355
        %v357 = vpop.f32.mrb[0].mxu0
        %v358 = vadd.f32 %v275, %v357
        %359 = vdwg.mxu0
        %v360 = vtanh.pop %v356
        %v361 = vtanh.pop %v358
        %362 = vst [vmem:[%s201] sm:$0xff] %v360
        %363 = vst [vmem:[%s201 + $0x8] sm:$0xff] %v361
        %s364 = sand.u32 %s97, 1
        %s365 = scalar_lea.sflag [#allocation4], %s364
        %s366 = sand.u32 %s97, 1
        %s367 = smul.addr %s366, 16
        %s368 = scalar_lea.vmem [#allocation7], %s367
        // Predicated region
        $region41: #{tpu_custom_call.1} parent=31 // pred_check
          %p369 = pneg %p107
        $region42: #{tpu_custom_call.1} parent=31 // pred_check_branch
          %371 = sbr.rel (%p369) target = $region44
        $region43: #{tpu_custom_call.1} parent=31 // pred_region
          %s373 = ssub.s32 256, 256
          %374 = vsyncadd %s365, %s373
          %s375 = smul.addr %s21, 2
          %s376 = smul.addr %s375, 128
          %s377 = scalar_lea.hbm %s3, %s376
          %s379 = sshll.u32 %s368, 4
          %s380 = int_to_ptr.vmem [resolvable:$true] %s379
          %382 = dma.vmem_to_hbm [thread:$0]  %s380, 256, %s377, %s365
        $region44: #{tpu_custom_call.1} parent=31 // pred_fallthru
          _
      $region32: #{tpu_custom_call.1} parent=5 // pred_fallthru
        _
      %p383 = scmp.le.s32.totalorder 2, %s16
      // Predicated region
      $region45: #{tpu_custom_call.1} parent=5 // pred_check
        %p384 = pneg %p383
      $region46: #{tpu_custom_call.1} parent=5 // pred_check_branch
        %386 = sbr.rel (%p384) target = $region48
      $region47: #{tpu_custom_call.1} parent=5 // pred_region
        %s387 = ssub.s32 %s16, 2
        // Predicated region
        $region49: #{tpu_custom_call.1} parent=47 // pred_check
          %p388 = pneg %p113
        $region50: #{tpu_custom_call.1} parent=47 // pred_check_branch
          %390 = sbr.rel (%p388) target = $region52
        $region51: #{tpu_custom_call.1} parent=47 // pred_region
          %s391 = sand.u32 %s98, 1
          %s392 = scalar_lea.sflag [#allocation4], %s391
          %s393 = sand.u32 %s98, 1
          %s394 = smul.addr %s393, 16
          %s395 = scalar_lea.vmem [#allocation7], %s394
          %396 = dma.done %s392, 256
        $region52: #{tpu_custom_call.1} parent=47 // pred_fallthru
          _
      $region48: #{tpu_custom_call.1} parent=5 // pred_fallthru
        _
    $region6: #{tpu_custom_call.1} parent=1 // loop_footer
      %s20 = sadd.s32 1, %s16
    $region7: #{tpu_custom_call.1} parent=1 // loop_footer_branch
      %15 = sbr.rel target = $region3
    $region8: #{tpu_custom_call.1} parent=1 // loop_exit
      _
    %397 = vsyncpa [#allocation3], 1
    %s398 = scalar_lea.sflag [#allocation3], 1
    %399 = vsyncpa %s398, 1
    %400 = vsyncpa [#allocation6], 1
    %401 = vsyncpa [#allocation4], 1
    %s402 = scalar_lea.sflag [#allocation4], 1
    %403 = vsyncpa %s402, 1

</llo_original>
